<compile_context>
chip_gen: v7x
topology: tpu7x:2x2x1
jax: 0.10.0
libtpu: 0.0.40
codegen_flags: <defaults>
</compile_context>

<pallas_src>
import jax
import jax.numpy as jnp
from jax.experimental import pallas as pl
from jax.experimental.pallas import tpu as pltpu


def projection_kernel(embed_ref, w_ref, params_ref, out_ref):
    # embed_ref:  (B, E)   text embedding
    # w_ref:      (E, P)   Linear weight (pre-transposed so we can do x @ W)
    # params_ref: (2, P)   row 0 = BN gamma, row 1 = BN beta
    # out_ref:    (B, P)   projected embedding
    x = embed_ref[...]

    # Linear (MXU). Bias intentionally omitted: it cancels under training-mode
    # BatchNorm (batch-mean subtraction).
    proj = jnp.dot(x, w_ref[...], preferred_element_type=jnp.float32)

    # BatchNorm1d, training mode: batch statistics, biased variance, eps=1e-5.
    mean = jnp.mean(proj, axis=0, keepdims=True)
    var = jnp.mean((proj - mean) ** 2, axis=0, keepdims=True)
    norm = (proj - mean) * jax.lax.rsqrt(var + 1e-5)

    gamma = params_ref[0:1, :]   # static slices -> zero-cost ref views
    beta = params_ref[1:2, :]
    y = norm * gamma + beta

    # LeakyReLU(negative_slope=0.2)
    y = jnp.where(y > 0, y, 0.2 * y)

    out_ref[...] = y.astype(out_ref.dtype)


def concat_embed(inp, embed, w, b, gamma, beta):
    """inp: (B, C, 1, 1) NCHW, embed: (B, E). Returns (B, C+P, 1, 1).

    `b` (Linear bias) is accepted for API fidelity with the PyTorch module but
    is not needed: training-mode BatchNorm cancels it exactly.
    """
    B, C, H, W = inp.shape
    assert H == 1 and W == 1, "cat along dim 1 requires 1x1 spatial dims"
    E, P = w.shape
    assert embed.shape == (B, E)
    del b  # exactly cancelled by BN batch-mean subtraction (training mode)

    # Pack per-channel BN params into a single operand: (2, P).
    params = jnp.stack([gamma, beta], axis=0)

    proj = pl.pallas_call(
        projection_kernel,
        out_shape=jax.ShapeDtypeStruct((B, P), embed.dtype),
        in_specs=[pl.BlockSpec(memory_space=pltpu.MemorySpace.VMEM)] * 3,
        out_specs=pl.BlockSpec(memory_space=pltpu.MemorySpace.VMEM),
    )(embed, w, params)

    # Channel concat (pure pass-through of `inp`) done in XLA; re-attach the
    # 1x1 spatial dims with a free reshape.
    out2d = jnp.concatenate([inp.reshape(B, C), proj.astype(inp.dtype)], axis=1)
    return out2d.reshape(B, C + P, 1, 1)


if __name__ == "__main__":
    # Small shapes consistent with the forward pass.
    B, C = 2, 4            # batch, inp channels (inp is (B, C, 1, 1))
    E, P = 32, 16          # embed_dim, projected_embed_dim

    key = jax.random.PRNGKey(0)
    k_inp, k_emb, k_w, k_b, k_g, k_bt = jax.random.split(key, 6)

    inp = jax.random.normal(k_inp, (B, C, 1, 1), dtype=jnp.float32)
    embed = jax.random.normal(k_emb, (B, E), dtype=jnp.float32)

    # Deterministic parameter init (Linear weight stored pre-transposed (E, P)).
    w = jax.random.normal(k_w, (E, P), dtype=jnp.float32) * 0.1
    b = jax.random.normal(k_b, (P,), dtype=jnp.float32) * 0.1
    gamma = 1.0 + 0.1 * jax.random.normal(k_g, (P,), dtype=jnp.float32)
    beta = 0.1 * jax.random.normal(k_bt, (P,), dtype=jnp.float32)

    out = concat_embed(inp, embed, w, b, gamma, beta)
    jax.block_until_ready(out)
    assert out.shape == (B, C + P, 1, 1)
    print("KERNEL_OK")
</pallas_src>

<mosaic_0001>
module attributes {stable_mosaic.version = 11 : i64} {
  func.func @projection_kernel(%arg0: memref<2x32xf32, #tpu.memory_space<vmem>>, %arg1: memref<32x16xf32, #tpu.memory_space<vmem>>, %arg2: memref<2x16xf32, #tpu.memory_space<vmem>>, %arg3: memref<2x16xf32, #tpu.memory_space<vmem>>) attributes {dimension_semantics = [], scalar_prefetch = 0 : i64, scratch_operands = 0 : i64, tpu.core_type = #tpu.core_type<tc>} {
    %c0 = arith.constant 0 : index
    %c0_0 = arith.constant 0 : index
    %0 = vector.load %arg0[%c0, %c0_0] : memref<2x32xf32, #tpu.memory_space<vmem>>, vector<2x32xf32>
    %c0_1 = arith.constant 0 : index
    %c0_2 = arith.constant 0 : index
    %1 = vector.load %arg1[%c0_1, %c0_2] : memref<32x16xf32, #tpu.memory_space<vmem>>, vector<32x16xf32>
    %cst = arith.constant dense<0.000000e+00> : vector<2x16xf32>
    %2 = tpu.matmul %0, %1, %cst {dimension_numbers = #tpu.dot_dimension_numbers<[1], [0], [0], [1], [0, 0, 1, 1], [], []>} : vector<2x32xf32>, vector<32x16xf32>, vector<2x16xf32> -> vector<2x16xf32>
    %cst_3 = arith.constant dense<0.000000e+00> : vector<16xf32>
    %3 = vector.multi_reduction <add>, %2, %cst_3 [0] : vector<2x16xf32> to vector<16xf32>
    %4 = vector.shape_cast %3 : vector<16xf32> to vector<1x16xf32>
    %cst_4 = arith.constant 2.000000e+00 : f32
    %5 = vector.broadcast %cst_4 : f32 to vector<1x16xf32>
    %6 = arith.divf %4, %5 : vector<1x16xf32>
    %7 = vector.broadcast %6 : vector<1x16xf32> to vector<2x16xf32>
    %8 = arith.subf %2, %7 : vector<2x16xf32>
    %9 = arith.mulf %8, %8 : vector<2x16xf32>
    %cst_5 = arith.constant dense<0.000000e+00> : vector<16xf32>
    %10 = vector.multi_reduction <add>, %9, %cst_5 [0] : vector<2x16xf32> to vector<16xf32>
    %11 = vector.shape_cast %10 : vector<16xf32> to vector<1x16xf32>
    %cst_6 = arith.constant 2.000000e+00 : f32
    %12 = vector.broadcast %cst_6 : f32 to vector<1x16xf32>
    %13 = arith.divf %11, %12 : vector<1x16xf32>
    %14 = vector.broadcast %6 : vector<1x16xf32> to vector<2x16xf32>
    %15 = arith.subf %2, %14 : vector<2x16xf32>
    %cst_7 = arith.constant 9.99999974E-6 : f32
    %16 = vector.broadcast %cst_7 : f32 to vector<1x16xf32>
    %17 = arith.addf %13, %16 : vector<1x16xf32>
    %18 = math.rsqrt %17 : vector<1x16xf32>
    %19 = vector.broadcast %18 : vector<1x16xf32> to vector<2x16xf32>
    %20 = arith.mulf %15, %19 : vector<2x16xf32>
    %c0_8 = arith.constant 0 : index
    %c0_9 = arith.constant 0 : index
    %21 = vector.load %arg2[%c0_8, %c0_9] : memref<2x16xf32, #tpu.memory_space<vmem>>, vector<1x16xf32>
    %c1 = arith.constant 1 : index
    %c0_10 = arith.constant 0 : index
    %22 = vector.load %arg2[%c1, %c0_10] : memref<2x16xf32, #tpu.memory_space<vmem>>, vector<1x16xf32>
    %23 = vector.broadcast %21 : vector<1x16xf32> to vector<2x16xf32>
    %24 = arith.mulf %20, %23 : vector<2x16xf32>
    %25 = vector.broadcast %22 : vector<1x16xf32> to vector<2x16xf32>
    %26 = arith.addf %24, %25 : vector<2x16xf32>
    %cst_11 = arith.constant 0.000000e+00 : f32
    %27 = vector.broadcast %cst_11 : f32 to vector<2x16xf32>
    %28 = arith.cmpf ogt, %26, %27 : vector<2x16xf32>
    %cst_12 = arith.constant 2.000000e-01 : f32
    %29 = vector.broadcast %cst_12 : f32 to vector<2x16xf32>
    %30 = arith.mulf %29, %26 : vector<2x16xf32>
    %31 = arith.select %28, %26, %30 : vector<2x16xi1>, vector<2x16xf32>
    %c0_13 = arith.constant 0 : index
    %c0_14 = arith.constant 0 : index
    %32 = vector.load %arg3[%c0_13, %c0_14] : memref<2x16xf32, #tpu.memory_space<vmem>>, vector<2x16xf32>
    tpu.vector_store %arg3[%c0_13, %c0_14], %31 {strides = array<i32>} : memref<2x16xf32, #tpu.memory_space<vmem>>, vector<2x16xf32>,
    return
  }
}

</mosaic_0001>

<llo_original>
// kernel: tpu_custom_call.1
$region0: #{tpu_custom_call.1}
  #allocation0 [shape = 'u32[]', space=smem, size = 0x4, offset = 0x4, fixed_abs, tag = 'smem constant byte address 0x4 - core index']
  #allocation1 [shape = 'u32[144,128]{1,0:T(1,128)}', space=vmem, size = 0x12000, scoped, tag = 'internal scratch']
  %s0 = inlined_call_operand.vmem [shape: f32[2,32], index: 0, kind: input, shape index: {}]
  %s1 = inlined_call_operand.vmem [shape: f32[32,16], index: 1, kind: input, shape index: {}]
  %s2 = inlined_call_operand.vmem [shape: f32[2,16], index: 2, kind: input, shape index: {}]
  %s3 = inlined_call_operand.hbm [shape: f32[2,16], index: 3, kind: output, shape index: {}]
  %s4 = sld [smem:[#allocation0]]
  $region22: #{tpu_custom_call.1} parent=0
    _
  %s6 = ssub.s32 1, %s4
  %s7 = scalar_select 0, %s6, %s4
  $region1: #{tpu_custom_call.1} parent=0
    #allocation2 [shape = 'u8[1024]{0}', space=vmem, size = 0x400, scoped, tag = 'output window, operand 0, single buffered']
    #allocation3 [shape = 's32[1]{0}', space=sflag, size = 0x4, scoped, tag = 'scoped memory for tpu_custom_call.1']
    %8 = vsyncpa [#allocation3], 0
    // Predicated region
    $region2: #{tpu_custom_call.1} parent=1 // pred_check
      _
    $region3: #{tpu_custom_call.1} parent=1 // pred_check_branch
      %10 = sbr.rel (0) target = $region5
    $region4: #{tpu_custom_call.1} parent=1 // pred_region
      _
    $region5: #{tpu_custom_call.1} parent=1 // pred_fallthru
      _
    // Predicated region
    $region6: #{tpu_custom_call.1} parent=1 // pred_check
      _
    $region7: #{tpu_custom_call.1} parent=1 // pred_check_branch
      %12 = sbr.rel (0) target = $region9
    $region8: #{tpu_custom_call.1} parent=1 // pred_region
      _
    $region9: #{tpu_custom_call.1} parent=1 // pred_fallthru
      _
    // Predicated region
    $region10: #{tpu_custom_call.1} parent=1 // pred_check
      _
    $region11: #{tpu_custom_call.1} parent=1 // pred_check_branch
      %14 = sbr.rel (0) target = $region13
    $region12: #{tpu_custom_call.1} parent=1 // pred_region
      _
    $region13: #{tpu_custom_call.1} parent=1 // pred_fallthru
      _
    %v15 = vld [vmem:[%s0] sm:$0x3]
    %v16 = vld [vmem:[%s1] sm:$0xff]
    %v17 = vld [vmem:[%s1 + $0x8] sm:$0xff]
    %v18 = vld [vmem:[%s1 + $0x10] sm:$0xff]
    %v19 = vld [vmem:[%s1 + $0x18] sm:$0xff]
    %vm20 = vcmask 261120
    %v22 = vsel %vm20, %v15, 0
    %24 = vmatprep.subr.mxu0 0.0
    %25 = vmatpush1.msra.mxu0 %v16
    %26 = vmatprep.subr.mxu0 0.0
    %27 = vmatpush1.msra.mxu0 %v17
    %28 = vmatprep.subr.mxu0 0.0
    %29 = vmatpush1.msra.mxu0 %v18
    %30 = vmatprep.subr.mxu0 0.0
    %31 = vmatpush1.msra.mxu0 %v19
    %32 = vmatprep.subr.mxu0 0.0
    %33 = vmatpush1.msra.mxu0 0.0
    %34 = vmatprep.subr.mxu0 0.0
    %35 = vmatpush1.msra.mxu0 0.0
    %36 = vmatprep.subr.mxu0 0.0
    %37 = vmatpush1.msra.mxu0 0.0
    %38 = vmatprep.subr.mxu0 0.0
    %39 = vmatpush1.msra.mxu0 0.0
    %40 = vmatprep.subr.mxu0 0.0
    %41 = vmatpush1.msra.mxu0 0.0
    %42 = vmatprep.subr.mxu0 0.0
    %43 = vmatpush1.msra.mxu0 0.0
    %44 = vmatprep.subr.mxu0 0.0
    %45 = vmatpush1.msra.mxu0 0.0
    %46 = vmatprep.subr.mxu0 0.0
    %47 = vmatpush1.msra.mxu0 0.0
    %48 = vmatprep.subr.mxu0 0.0
    %49 = vmatpush1.msra.mxu0 0.0
    %50 = vmatprep.subr.mxu0 0.0
    %51 = vmatpush1.msra.mxu0 0.0
    %52 = vmatprep.subr.mxu0 0.0
    %53 = vmatpush1.msra.mxu0 0.0
    %54 = vmatprep.subr.mxu0 0.0
    %55 = vmatpush1.msra.mxu0 0.0
    %56 = vmatprep.subr.mxu0 0.0
    %57 = vmatpush1.msra.mxu0 0.0
    %58 = vmatprep.subr.mxu0 0.0
    %59 = vmatpush1.msra.mxu0 0.0
    %60 = vmatprep.subr.mxu0 0.0
    %61 = vmatpush1.msra.mxu0 0.0
    %62 = vmatprep.subr.mxu0 0.0
    %63 = vmatpush1.msra.mxu0 0.0
    %64 = vmatprep.subr.mxu0 0.0
    %65 = vmatpush1.msra.mxu0 0.0
    %66 = vmatprep.subr.mxu0 0.0
    %67 = vmatpush1.msra.mxu0 0.0
    %68 = vmatprep.subr.mxu0 0.0
    %69 = vmatpush1.msra.mxu0 0.0
    %70 = vmatprep.subr.mxu0 0.0
    %71 = vmatpush1.msra.mxu0 0.0
    %72 = vmatprep.subr.mxu0 0.0
    %73 = vmatpush1.msra.mxu0 0.0
    %74 = vmatprep.subr.mxu0 0.0
    %75 = vmatpush1.msra.mxu0 0.0
    %76 = vmatprep.subr.mxu0 0.0
    %77 = vmatpush1.msra.mxu0 0.0
    %78 = vmatprep.subr.mxu0 0.0
    %79 = vmatpush1.msra.mxu0 0.0
    %80 = vmatprep.subr.mxu0 0.0
    %81 = vmatpush1.msra.mxu0 0.0
    %82 = vmatprep.subr.mxu0 0.0
    %83 = vmatpush1.msra.mxu0 0.0
    %84 = vmatprep.subr.mxu0 0.0
    %85 = vmatpush1.msra.mxu0 0.0
    %86 = vmatprep.subr.mxu0 0.0
    %87 = vmatpush1.msra.mxu0 0.0
    %88 = vmatprep.mubr.f32.mxu0 0.0
    %89 = vmatmul.mubr.f32.gmra.mrb[0].mxu0 %v22
    %v90 = vpop.f32.mrb[0].mxu0
    %v91 = vadd.f32 0.0, %v90
    %v92 = vpop.f32.mrb[0].mxu0
    %93 = vdwg.mxu0
    %vm94 = vcmask 123904
    %v95 = vsel %vm94, %v91, 0.0
    %v96 = vrot.slane %v95, 4
    %v97 = vadd.f32 %v95, %v96
    %v98 = vrot.slane %v97, 2
    %v99 = vadd.f32 %v97, %v98
    %v100 = vrot.slane %v99, 1
    %v101 = vadd.f32 %v99, %v100
    %v102 = vrcp.pop 2.0
    %v103 = vmul.f32 %v101, %v102
    %v104 = vsub.f32 %v91, %v103
    %v105 = vmul.f32 %v104, %v104
    %v106 = vsel %vm94, %v105, 0.0
    %v107 = vrot.slane %v106, 4
    %v108 = vadd.f32 %v106, %v107
    %v109 = vrot.slane %v108, 2
    %v110 = vadd.f32 %v108, %v109
    %v111 = vrot.slane %v110, 1
    %v112 = vadd.f32 %v110, %v111
    %v113 = vmul.f32 %v112, %v102
    %v114 = vadd.f32 %v113, 1e-05
    %v115 = vrsqrt.pop %v114
    %v116 = vmul.f32 %v104, %v115
    %v117 = vld [vmem:[%s2] sm:$0x1]
    %v118 = vld [vmem:[%s2 + $0x1] sm:$0x1]
    %v119 = vlaneseq
    %v120 = vshrl.u32 %v119, 7
    %v121 = vsub.s32 0, %v120
    %v122 = vrot.slane %v117, %v121
    %v123 = vmul.f32 %v116, %v122
    %v124 = vlaneseq
    %v125 = vshrl.u32 %v124, 7
    %v126 = vsub.s32 0, %v125
    %v127 = vrot.slane %v118, %v126
    %v128 = vadd.f32 %v123, %v127
    %vm129 = vcmp.gt.f32.partialorder %v128, 0.0
    %v130 = vmul.f32 %v128, 0.2
    %v131 = vsel %vm129, %v128, %v130
    %132 = vst.msk [vmem:[#allocation2] sm:$0x3] %vm94, %v131
    // Predicated region
    $region14: #{tpu_custom_call.1} parent=1 // pred_check
      _
    $region15: #{tpu_custom_call.1} parent=1 // pred_check_branch
      %134 = sbr.rel (0) target = $region17
    $region16: #{tpu_custom_call.1} parent=1 // pred_region
      %s136 = ssub.s32 32, 32
      %137 = vsyncadd [#allocation3], %s136
      %s139 = sshll.u32 [#allocation2], 4
      %s140 = int_to_ptr.vmem [resolvable:$true] %s139
      %142 = dma.vmem_to_hbm [thread:$0]  %s140, 32, %s3, [#allocation3]
    $region17: #{tpu_custom_call.1} parent=1 // pred_fallthru
      _
    // Predicated region
    $region18: #{tpu_custom_call.1} parent=1 // pred_check
      _
    $region19: #{tpu_custom_call.1} parent=1 // pred_check_branch
      %144 = sbr.rel (0) target = $region21
    $region20: #{tpu_custom_call.1} parent=1 // pred_region
      %145 = dma.done [#allocation3], 32
    $region21: #{tpu_custom_call.1} parent=1 // pred_fallthru
      _
    %146 = vsyncpa [#allocation3], 1

</llo_original>
